<compile_context>
chip_gen: v6e
topology: v6e:2x2x1
jax: 0.10.0
libtpu: 0.0.40
codegen_flags: <defaults>
</compile_context>

<pallas_src>
import numpy as np
import jax
import jax.numpy as jnp
from jax.experimental import pallas as pl
from jax.experimental.pallas import tpu as pltpu


def mlp_kernel(x_ref,
               w1_ref, b1_ref,
               w2_ref, b2_ref,
               w3_ref, b3_ref,
               w4_ref, b4_ref,
               w5_ref, b5_ref,
               out_ref):
    # x_ref: [D_in, TILE_N]  (feature-major, batch on the lane axis)
    x = x_ref[...]

    def linear(w_ref, b_ref, h):
        # [out, in] @ [in, TILE_N] -> [out, TILE_N]; bias [out, 1] broadcasts over
        # the lane (batch) axis.  f32 accumulation on the MXU.
        return jnp.dot(w_ref[...], h, preferred_element_type=jnp.float32) + b_ref[...]

    y1 = jnp.tanh(linear(w1_ref, b1_ref, x))
    y2 = jnp.tanh(linear(w2_ref, b2_ref, y1))
    y3 = jnp.tanh(linear(w3_ref, b3_ref, y2)) + y1      # residual
    y4 = jnp.tanh(linear(w4_ref, b4_ref, y3)) + y2      # residual
    out_ref[...] = linear(w5_ref, b5_ref, y4).astype(out_ref.dtype)


def multilayer_net_forward(x, params, *, tile_n=4096):
    """x: [N, D_in] float32; params: list of (W [out, in], b [out, 1]).

    Returns [N, D_out] float32, matching the PyTorch module's forward."""
    n, d_in = x.shape
    d_out = params[-1][0].shape[0]

    # Lane-dense batch tile: multiple of 128, capped at tile_n.
    tile = int(min(tile_n, pl.cdiv(n, 128) * 128))
    n_pad = int(pl.cdiv(n, tile) * tile)

    # Feature-major input [D_in, N_pad]; padded tail is zeros and sliced off below
    # (layout plumbing stays in the wrapper, the kernel output is lane-dense).
    x_t = jnp.zeros((d_in, n_pad), x.dtype).at[:, :n].set(x.T)

    flat_args = [x_t]
    in_specs = [pl.BlockSpec((d_in, tile), lambda i: (0, i))]
    for w, b in params:
        flat_args.extend([w, b])
        # Constant index_map -> weights/biases resident in VMEM for the whole grid.
        in_specs.append(pl.BlockSpec(w.shape, lambda i: (0, 0)))
        in_specs.append(pl.BlockSpec(b.shape, lambda i: (0, 0)))

    out_t = pl.pallas_call(
        mlp_kernel,
        out_shape=jax.ShapeDtypeStruct((d_out, n_pad), jnp.float32),
        grid=(n_pad // tile,),
        in_specs=in_specs,
        out_specs=pl.BlockSpec((d_out, tile), lambda i: (0, i)),
        compiler_params=pltpu.CompilerParams(
            dimension_semantics=("parallel",)),
    )(*flat_args)

    return out_t[:, :n].T  # [N, D_out]


def init_params(key, d_in, h, d_out):
    """Deterministic init matching the PyTorch module's normal_ init scheme.

    Weights kept in PyTorch [out, in] orientation (kernel computes W @ h).
    Biases ~ N(0, 1), stored as [out, 1] so they broadcast over the lane axis."""
    dims = [(d_in, h), (h, h), (h, h), (h, h), (h, d_out)]
    params = []
    for (fan_in, fan_out) in dims:
        key, kw, kb = jax.random.split(key, 3)
        std = np.sqrt(2.0 / (fan_in + fan_out)).astype(np.float32)
        w = jax.random.normal(kw, (fan_out, fan_in), dtype=jnp.float32) * std  # [out, in]
        b = jax.random.normal(kb, (fan_out,), dtype=jnp.float32)               # [out]
        params.append((w, b.reshape(fan_out, 1)))
    return params


def _ref_forward(x, params):
    # Pure-JAX reference with the same semantics as the PyTorch module (batch-major).
    (w1, b1), (w2, b2), (w3, b3), (w4, b4), (w5, b5) = params
    y1 = jnp.tanh(x @ w1.T + b1.T)
    y2 = jnp.tanh(y1 @ w2.T + b2.T)
    y3 = jnp.tanh(y2 @ w3.T + b3.T) + y1
    y4 = jnp.tanh(y3 @ w4.T + b4.T) + y2
    return y4 @ w5.T + b5.T


if __name__ == "__main__":
    # Shapes consistent with the module's usage: n_test 2-D collocation points.
    N, D_in, H, D_out = 100, 2, 32, 1

    key = jax.random.PRNGKey(0)
    key, kx = jax.random.split(key)
    x = jax.random.normal(kx, (N, D_in), dtype=jnp.float32)

    params = init_params(key, D_in, H, D_out)

    # Single-tile path (N=100 -> one 128-wide tile).
    out = multilayer_net_forward(x, params)
    jax.block_until_ready(out)
    assert out.shape == (N, D_out)
    ref = _ref_forward(x, params)
    np.testing.assert_allclose(np.asarray(out), np.asarray(ref), rtol=1e-5, atol=1e-5)

    # Multi-tile streaming path (forces a 3-step grid with tile=128).
    key, kx2 = jax.random.split(key)
    x2 = jax.random.normal(kx2, (300, D_in), dtype=jnp.float32)
    out2 = multilayer_net_forward(x2, params, tile_n=128)
    jax.block_until_ready(out2)
    np.testing.assert_allclose(np.asarray(out2), np.asarray(_ref_forward(x2, params)),
                               rtol=1e-5, atol=1e-5)

    print("KERNEL_OK")
</pallas_src>

<mosaic_0001>
module attributes {stable_mosaic.version = 11 : i64} {
  func.func @mlp_kernel(%arg0: i32, %arg1: memref<2x128xf32, #tpu.memory_space<vmem>>, %arg2: memref<32x2xf32, #tpu.memory_space<vmem>>, %arg3: memref<32x1xf32, #tpu.memory_space<vmem>>, %arg4: memref<32x32xf32, #tpu.memory_space<vmem>>, %arg5: memref<32x1xf32, #tpu.memory_space<vmem>>, %arg6: memref<32x32xf32, #tpu.memory_space<vmem>>, %arg7: memref<32x1xf32, #tpu.memory_space<vmem>>, %arg8: memref<32x32xf32, #tpu.memory_space<vmem>>, %arg9: memref<32x1xf32, #tpu.memory_space<vmem>>, %arg10: memref<1x32xf32, #tpu.memory_space<vmem>>, %arg11: memref<1x1xf32, #tpu.memory_space<vmem>>, %arg12: memref<1x128xf32, #tpu.memory_space<vmem>>) attributes {dimension_semantics = [#tpu.dimension_semantics<parallel>], iteration_bounds = array<i64: 1>, scalar_prefetch = 0 : i64, scratch_operands = 0 : i64, tpu.core_type = #tpu.core_type<tc>, window_params = [{transform_indices = @transform_0, window_bounds = array<i64: 2, 128>}, {pipeline_mode = #tpu.pipeline_mode<synchronous>, transform_indices = @transform_1, window_bounds = array<i64: 32, 2>}, {pipeline_mode = #tpu.pipeline_mode<synchronous>, transform_indices = @transform_2, window_bounds = array<i64: 32, 1>}, {pipeline_mode = #tpu.pipeline_mode<synchronous>, transform_indices = @transform_3, window_bounds = array<i64: 32, 32>}, {pipeline_mode = #tpu.pipeline_mode<synchronous>, transform_indices = @transform_4, window_bounds = array<i64: 32, 1>}, {pipeline_mode = #tpu.pipeline_mode<synchronous>, transform_indices = @transform_5, window_bounds = array<i64: 32, 32>}, {pipeline_mode = #tpu.pipeline_mode<synchronous>, transform_indices = @transform_6, window_bounds = array<i64: 32, 1>}, {pipeline_mode = #tpu.pipeline_mode<synchronous>, transform_indices = @transform_7, window_bounds = array<i64: 32, 32>}, {pipeline_mode = #tpu.pipeline_mode<synchronous>, transform_indices = @transform_8, window_bounds = array<i64: 32, 1>}, {pipeline_mode = #tpu.pipeline_mode<synchronous>, transform_indices = @transform_9, window_bounds = array<i64: 1, 32>}, {pipeline_mode = #tpu.pipeline_mode<synchronous>, transform_indices = @transform_10, window_bounds = array<i64: 1, 1>}, {transform_indices = @transform_11, window_bounds = array<i64: 1, 128>}]} {
    %c0 = arith.constant 0 : index
    %c0_0 = arith.constant 0 : index
    %0 = vector.load %arg1[%c0, %c0_0] : memref<2x128xf32, #tpu.memory_space<vmem>>, vector<2x128xf32>
    %c0_1 = arith.constant 0 : index
    %c0_2 = arith.constant 0 : index
    %1 = vector.load %arg2[%c0_1, %c0_2] : memref<32x2xf32, #tpu.memory_space<vmem>>, vector<32x2xf32>
    %cst = arith.constant dense<0.000000e+00> : vector<32x128xf32>
    %2 = tpu.matmul %1, %0, %cst {dimension_numbers = #tpu.dot_dimension_numbers<[1], [0], [0], [1], [0, 0, 1, 1], [], []>} : vector<32x2xf32>, vector<2x128xf32>, vector<32x128xf32> -> vector<32x128xf32>
    %c0_3 = arith.constant 0 : index
    %c0_4 = arith.constant 0 : index
    %3 = vector.load %arg3[%c0_3, %c0_4] : memref<32x1xf32, #tpu.memory_space<vmem>>, vector<32x1xf32>
    %4 = vector.broadcast %3 : vector<32x1xf32> to vector<32x128xf32>
    %5 = arith.addf %2, %4 : vector<32x128xf32>
    %6 = math.tanh %5 : vector<32x128xf32>
    %c0_5 = arith.constant 0 : index
    %c0_6 = arith.constant 0 : index
    %7 = vector.load %arg4[%c0_5, %c0_6] : memref<32x32xf32, #tpu.memory_space<vmem>>, vector<32x32xf32>
    %cst_7 = arith.constant dense<0.000000e+00> : vector<32x128xf32>
    %8 = tpu.matmul %7, %6, %cst_7 {dimension_numbers = #tpu.dot_dimension_numbers<[1], [0], [0], [1], [0, 0, 1, 1], [], []>} : vector<32x32xf32>, vector<32x128xf32>, vector<32x128xf32> -> vector<32x128xf32>
    %c0_8 = arith.constant 0 : index
    %c0_9 = arith.constant 0 : index
    %9 = vector.load %arg5[%c0_8, %c0_9] : memref<32x1xf32, #tpu.memory_space<vmem>>, vector<32x1xf32>
    %10 = vector.broadcast %9 : vector<32x1xf32> to vector<32x128xf32>
    %11 = arith.addf %8, %10 : vector<32x128xf32>
    %12 = math.tanh %11 : vector<32x128xf32>
    %c0_10 = arith.constant 0 : index
    %c0_11 = arith.constant 0 : index
    %13 = vector.load %arg6[%c0_10, %c0_11] : memref<32x32xf32, #tpu.memory_space<vmem>>, vector<32x32xf32>
    %cst_12 = arith.constant dense<0.000000e+00> : vector<32x128xf32>
    %14 = tpu.matmul %13, %12, %cst_12 {dimension_numbers = #tpu.dot_dimension_numbers<[1], [0], [0], [1], [0, 0, 1, 1], [], []>} : vector<32x32xf32>, vector<32x128xf32>, vector<32x128xf32> -> vector<32x128xf32>
    %c0_13 = arith.constant 0 : index
    %c0_14 = arith.constant 0 : index
    %15 = vector.load %arg7[%c0_13, %c0_14] : memref<32x1xf32, #tpu.memory_space<vmem>>, vector<32x1xf32>
    %16 = vector.broadcast %15 : vector<32x1xf32> to vector<32x128xf32>
    %17 = arith.addf %14, %16 : vector<32x128xf32>
    %18 = math.tanh %17 : vector<32x128xf32>
    %19 = arith.addf %18, %6 : vector<32x128xf32>
    %c0_15 = arith.constant 0 : index
    %c0_16 = arith.constant 0 : index
    %20 = vector.load %arg8[%c0_15, %c0_16] : memref<32x32xf32, #tpu.memory_space<vmem>>, vector<32x32xf32>
    %cst_17 = arith.constant dense<0.000000e+00> : vector<32x128xf32>
    %21 = tpu.matmul %20, %19, %cst_17 {dimension_numbers = #tpu.dot_dimension_numbers<[1], [0], [0], [1], [0, 0, 1, 1], [], []>} : vector<32x32xf32>, vector<32x128xf32>, vector<32x128xf32> -> vector<32x128xf32>
    %c0_18 = arith.constant 0 : index
    %c0_19 = arith.constant 0 : index
    %22 = vector.load %arg9[%c0_18, %c0_19] : memref<32x1xf32, #tpu.memory_space<vmem>>, vector<32x1xf32>
    %23 = vector.broadcast %22 : vector<32x1xf32> to vector<32x128xf32>
    %24 = arith.addf %21, %23 : vector<32x128xf32>
    %25 = math.tanh %24 : vector<32x128xf32>
    %26 = arith.addf %25, %12 : vector<32x128xf32>
    %c0_20 = arith.constant 0 : index
    %c0_21 = arith.constant 0 : index
    %27 = vector.load %arg10[%c0_20, %c0_21] : memref<1x32xf32, #tpu.memory_space<vmem>>, vector<1x32xf32>
    %cst_22 = arith.constant dense<0.000000e+00> : vector<1x128xf32>
    %28 = tpu.matmul %27, %26, %cst_22 {dimension_numbers = #tpu.dot_dimension_numbers<[1], [0], [0], [1], [0, 0, 1, 1], [], []>} : vector<1x32xf32>, vector<32x128xf32>, vector<1x128xf32> -> vector<1x128xf32>
    %c0_23 = arith.constant 0 : index
    %c0_24 = arith.constant 0 : index
    %29 = vector.load %arg11[%c0_23, %c0_24] : memref<1x1xf32, #tpu.memory_space<vmem>>, vector<1x1xf32>
    %30 = vector.broadcast %29 : vector<1x1xf32> to vector<1x128xf32>
    %31 = arith.addf %28, %30 : vector<1x128xf32>
    %c0_25 = arith.constant 0 : index
    %c0_26 = arith.constant 0 : index
    %32 = vector.load %arg12[%c0_25, %c0_26] : memref<1x128xf32, #tpu.memory_space<vmem>>, vector<1x128xf32>
    tpu.vector_store %arg12[%c0_25, %c0_26], %31 {strides = array<i32>} : memref<1x128xf32, #tpu.memory_space<vmem>>, vector<1x128xf32>,
    return
  }
  func.func @transform_0(%arg0: i32) -> (i32, i32) {
    %c0_i32 = arith.constant 0 : i32
    %c0_i32_0 = arith.constant 0 : i32
    return %c0_i32, %arg0 : i32, i32
  }
  func.func @transform_1(%arg0: i32) -> (i32, i32) {
    %c0_i32 = arith.constant 0 : i32
    %c0_i32_0 = arith.constant 0 : i32
    %c0_i32_1 = arith.constant 0 : i32
    return %c0_i32, %c0_i32_0 : i32, i32
  }
  func.func @transform_2(%arg0: i32) -> (i32, i32) {
    %c0_i32 = arith.constant 0 : i32
    %c0_i32_0 = arith.constant 0 : i32
    %c0_i32_1 = arith.constant 0 : i32
    return %c0_i32, %c0_i32_0 : i32, i32
  }
  func.func @transform_3(%arg0: i32) -> (i32, i32) {
    %c0_i32 = arith.constant 0 : i32
    %c0_i32_0 = arith.constant 0 : i32
    %c0_i32_1 = arith.constant 0 : i32
    return %c0_i32, %c0_i32_0 : i32, i32
  }
  func.func @transform_4(%arg0: i32) -> (i32, i32) {
    %c0_i32 = arith.constant 0 : i32
    %c0_i32_0 = arith.constant 0 : i32
    %c0_i32_1 = arith.constant 0 : i32
    return %c0_i32, %c0_i32_0 : i32, i32
  }
  func.func @transform_5(%arg0: i32) -> (i32, i32) {
    %c0_i32 = arith.constant 0 : i32
    %c0_i32_0 = arith.constant 0 : i32
    %c0_i32_1 = arith.constant 0 : i32
    return %c0_i32, %c0_i32_0 : i32, i32
  }
  func.func @transform_6(%arg0: i32) -> (i32, i32) {
    %c0_i32 = arith.constant 0 : i32
    %c0_i32_0 = arith.constant 0 : i32
    %c0_i32_1 = arith.constant 0 : i32
    return %c0_i32, %c0_i32_0 : i32, i32
  }
  func.func @transform_7(%arg0: i32) -> (i32, i32) {
    %c0_i32 = arith.constant 0 : i32
    %c0_i32_0 = arith.constant 0 : i32
    %c0_i32_1 = arith.constant 0 : i32
    return %c0_i32, %c0_i32_0 : i32, i32
  }
  func.func @transform_8(%arg0: i32) -> (i32, i32) {
    %c0_i32 = arith.constant 0 : i32
    %c0_i32_0 = arith.constant 0 : i32
    %c0_i32_1 = arith.constant 0 : i32
    return %c0_i32, %c0_i32_0 : i32, i32
  }
  func.func @transform_9(%arg0: i32) -> (i32, i32) {
    %c0_i32 = arith.constant 0 : i32
    %c0_i32_0 = arith.constant 0 : i32
    %c0_i32_1 = arith.constant 0 : i32
    return %c0_i32, %c0_i32_0 : i32, i32
  }
  func.func @transform_10(%arg0: i32) -> (i32, i32) {
    %c0_i32 = arith.constant 0 : i32
    %c0_i32_0 = arith.constant 0 : i32
    %c0_i32_1 = arith.constant 0 : i32
    return %c0_i32, %c0_i32_0 : i32, i32
  }
  func.func @transform_11(%arg0: i32) -> (i32, i32) {
    %c0_i32 = arith.constant 0 : i32
    %c0_i32_0 = arith.constant 0 : i32
    return %c0_i32, %arg0 : i32, i32
  }
}

</mosaic_0001>

<llo_original>
// kernel: tpu_custom_call.1
$region0: #{tpu_custom_call.1}
  #allocation0 [shape = 'u32[]', space=smem, size = 0x4, offset = 0x4, fixed_abs, tag = 'smem constant byte address 0x4 - core index']
  #allocation1 [shape = 'u32[144,128]{1,0:T(1,128)}', space=vmem, size = 0x12000, scoped, tag = 'internal scratch']
  #allocation2 [shape = 'f32[1,1]{1,0:T(1,128)S(1)}', space=vmem, size = 0x200, scoped, tag = 'scoped memory for tpu_custom_call.1']
  %s0 = inlined_call_operand.vmem [shape: f32[2,128], index: 0, kind: input, shape index: {}]
  %s1 = inlined_call_operand.vmem [shape: f32[32,2], index: 1, kind: input, shape index: {}]
  %s2 = inlined_call_operand.vmem [shape: f32[32,1], index: 2, kind: input, shape index: {}]
  %s3 = inlined_call_operand.vmem [shape: f32[32,32], index: 3, kind: input, shape index: {}]
  %s4 = inlined_call_operand.vmem [shape: f32[32,1], index: 4, kind: input, shape index: {}]
  %s5 = inlined_call_operand.vmem [shape: f32[32,32], index: 5, kind: input, shape index: {}]
  %s6 = inlined_call_operand.vmem [shape: f32[32,1], index: 6, kind: input, shape index: {}]
  %s7 = inlined_call_operand.vmem [shape: f32[32,32], index: 7, kind: input, shape index: {}]
  %s8 = inlined_call_operand.vmem [shape: f32[32,1], index: 8, kind: input, shape index: {}]
  %s9 = inlined_call_operand.vmem [shape: f32[1,32], index: 9, kind: input, shape index: {}]
  %s10 = inlined_call_operand.<no memory space> [shape: f32[1,1], index: 10, kind: input, shape index: {}]
  %s11 = inlined_call_operand.hbm [shape: f32[1,128], index: 11, kind: output, shape index: {}]
  %s12 = sld [smem:[#allocation0]]
  $region54: #{tpu_custom_call.1} parent=0
    _
  %s14 = ssub.s32 1, %s12
  %s15 = scalar_select 0, %s14, %s12
  %v16 = vstv %s10
  %17 = vst [vmem:[#allocation2] sm:$0x1] %v16
  $region1: #{tpu_custom_call.1} parent=0
    #allocation3 [shape = 'u8[512]{0}', space=vmem, size = 0x400, scoped, tag = 'output window, operand 0, single buffered']
    #allocation4 [shape = 's32[1]{0}', space=sflag, size = 0x4, scoped, tag = 'scoped memory for tpu_custom_call.1']
    %18 = vsyncpa [#allocation4], 0
    // Predicated region
    $region2: #{tpu_custom_call.1} parent=1 // pred_check
      _
    $region3: #{tpu_custom_call.1} parent=1 // pred_check_branch
      %20 = sbr.rel (0) target = $region5
    $region4: #{tpu_custom_call.1} parent=1 // pred_region
      _
    $region5: #{tpu_custom_call.1} parent=1 // pred_fallthru
      _
    // Predicated region
    $region6: #{tpu_custom_call.1} parent=1 // pred_check
      _
    $region7: #{tpu_custom_call.1} parent=1 // pred_check_branch
      %22 = sbr.rel (0) target = $region9
    $region8: #{tpu_custom_call.1} parent=1 // pred_region
      _
    $region9: #{tpu_custom_call.1} parent=1 // pred_fallthru
      _
    // Predicated region
    $region10: #{tpu_custom_call.1} parent=1 // pred_check
      _
    $region11: #{tpu_custom_call.1} parent=1 // pred_check_branch
      %24 = sbr.rel (0) target = $region13
    $region12: #{tpu_custom_call.1} parent=1 // pred_region
      _
    $region13: #{tpu_custom_call.1} parent=1 // pred_fallthru
      _
    // Predicated region
    $region14: #{tpu_custom_call.1} parent=1 // pred_check
      _
    $region15: #{tpu_custom_call.1} parent=1 // pred_check_branch
      %26 = sbr.rel (0) target = $region17
    $region16: #{tpu_custom_call.1} parent=1 // pred_region
      _
    $region17: #{tpu_custom_call.1} parent=1 // pred_fallthru
      _
    // Predicated region
    $region18: #{tpu_custom_call.1} parent=1 // pred_check
      _
    $region19: #{tpu_custom_call.1} parent=1 // pred_check_branch
      %28 = sbr.rel (0) target = $region21
    $region20: #{tpu_custom_call.1} parent=1 // pred_region
      _
    $region21: #{tpu_custom_call.1} parent=1 // pred_fallthru
      _
    // Predicated region
    $region22: #{tpu_custom_call.1} parent=1 // pred_check
      _
    $region23: #{tpu_custom_call.1} parent=1 // pred_check_branch
      %30 = sbr.rel (0) target = $region25
    $region24: #{tpu_custom_call.1} parent=1 // pred_region
      _
    $region25: #{tpu_custom_call.1} parent=1 // pred_fallthru
      _
    // Predicated region
    $region26: #{tpu_custom_call.1} parent=1 // pred_check
      _
    $region27: #{tpu_custom_call.1} parent=1 // pred_check_branch
      %32 = sbr.rel (0) target = $region29
    $region28: #{tpu_custom_call.1} parent=1 // pred_region
      _
    $region29: #{tpu_custom_call.1} parent=1 // pred_fallthru
      _
    // Predicated region
    $region30: #{tpu_custom_call.1} parent=1 // pred_check
      _
    $region31: #{tpu_custom_call.1} parent=1 // pred_check_branch
      %34 = sbr.rel (0) target = $region33
    $region32: #{tpu_custom_call.1} parent=1 // pred_region
      _
    $region33: #{tpu_custom_call.1} parent=1 // pred_fallthru
      _
    // Predicated region
    $region34: #{tpu_custom_call.1} parent=1 // pred_check
      _
    $region35: #{tpu_custom_call.1} parent=1 // pred_check_branch
      %36 = sbr.rel (0) target = $region37
    $region36: #{tpu_custom_call.1} parent=1 // pred_region
      _
    $region37: #{tpu_custom_call.1} parent=1 // pred_fallthru
      _
    // Predicated region
    $region38: #{tpu_custom_call.1} parent=1 // pred_check
      _
    $region39: #{tpu_custom_call.1} parent=1 // pred_check_branch
      %38 = sbr.rel (0) target = $region41
    $region40: #{tpu_custom_call.1} parent=1 // pred_region
      _
    $region41: #{tpu_custom_call.1} parent=1 // pred_fallthru
      _
    // Predicated region
    $region42: #{tpu_custom_call.1} parent=1 // pred_check
      _
    $region43: #{tpu_custom_call.1} parent=1 // pred_check_branch
      %40 = sbr.rel (0) target = $region45
    $region44: #{tpu_custom_call.1} parent=1 // pred_region
      _
    $region45: #{tpu_custom_call.1} parent=1 // pred_fallthru
      _
    %v41 = vld [vmem:[%s0] sm:$0x3]
    %v42 = vld [vmem:[%s1] sm:$0xff]
    %v43 = vld [vmem:[%s1 + $0x8] sm:$0xff]
    %v44 = vld [vmem:[%s1 + $0x10] sm:$0xff]
    %v45 = vld [vmem:[%s1 + $0x18] sm:$0xff]
    %v46 = vld [vmem:[%s2] sm:$0xff]
    %v47 = vld [vmem:[%s2 + $0x8] sm:$0xff]
    %v48 = vld [vmem:[%s2 + $0x10] sm:$0xff]
    %v49 = vld [vmem:[%s2 + $0x18] sm:$0xff]
    %51 = vset.pattern.permute.xlu0 0
    %52 = vperm.xlu0 %51, %v46
    %v53 = vpop.permute.xlu0 %52
    %56 = vset.pattern.permute.xlu0 0
    %57 = vperm.xlu0 %56, %v47
    %v58 = vpop.permute.xlu0 %57
    %61 = vset.pattern.permute.xlu0 0
    %62 = vperm.xlu0 %61, %v48
    %v63 = vpop.permute.xlu0 %62
    %66 = vset.pattern.permute.xlu0 0
    %67 = vperm.xlu0 %66, %v49
    %v68 = vpop.permute.xlu0 %67
    %vm70 = vcmask 15360
    %v72 = vsel %vm70, %v42, 0
    %v75 = vsel %vm70, %v43, 0
    %v78 = vsel %vm70, %v44, 0
    %v81 = vsel %vm70, %v45, 0
    %vm83 = vcmask 1041408
    %v85 = vsel %vm83, %v41, 0
    %87 = vmatprep.subr.mxu0 0.0
    %88 = vmatpush1.msra.mxu0 0.0
    %89 = vmatprep.subr.mxu0 0.0
    %90 = vmatpush1.msra.mxu0 0.0
    %91 = vmatprep.subr.mxu0 0.0
    %92 = vmatpush1.msra.mxu0 0.0
    %93 = vmatprep.subr.mxu0 0.0
    %94 = vmatpush1.msra.mxu0 0.0
    %95 = vmatprep.subr.mxu0 0.0
    %96 = vmatpush1.msra.mxu0 0.0
    %97 = vmatprep.subr.mxu0 0.0
    %98 = vmatpush1.msra.mxu0 0.0
    %99 = vmatprep.subr.mxu0 0.0
    %100 = vmatpush1.msra.mxu0 0.0
    %101 = vmatprep.subr.mxu0 0.0
    %102 = vmatpush1.msra.mxu0 0.0
    %103 = vmatprep.subr.mxu0 0.0
    %104 = vmatpush1.msra.mxu0 0.0
    %105 = vmatprep.subr.mxu0 0.0
    %106 = vmatpush1.msra.mxu0 0.0
    %107 = vmatprep.subr.mxu0 0.0
    %108 = vmatpush1.msra.mxu0 0.0
    %109 = vmatprep.subr.mxu0 0.0
    %110 = vmatpush1.msra.mxu0 0.0
    %111 = vmatprep.subr.mxu0 0.0
    %112 = vmatpush1.msra.mxu0 0.0
    %113 = vmatprep.subr.mxu0 0.0
    %114 = vmatpush1.msra.mxu0 0.0
    %115 = vmatprep.subr.mxu0 0.0
    %116 = vmatpush1.msra.mxu0 0.0
    %117 = vmatprep.subr.mxu0 0.0
    %118 = vmatpush1.msra.mxu0 %v85
    %119 = vmatprep.subr.mxu0 0.0
    %120 = vmatpush2.msra.mxu0 0.0
    %121 = vmatprep.subr.mxu0 0.0
    %122 = vmatpush2.msra.mxu0 0.0
    %123 = vmatprep.subr.mxu0 0.0
    %124 = vmatpush2.msra.mxu0 0.0
    %125 = vmatprep.subr.mxu0 0.0
    %126 = vmatpush2.msra.mxu0 0.0
    %127 = vmatprep.subr.mxu0 0.0
    %128 = vmatpush2.msra.mxu0 0.0
    %129 = vmatprep.subr.mxu0 0.0
    %130 = vmatpush2.msra.mxu0 0.0
    %131 = vmatprep.subr.mxu0 0.0
    %132 = vmatpush2.msra.mxu0 0.0
    %133 = vmatprep.subr.mxu0 0.0
    %134 = vmatpush2.msra.mxu0 0.0
    %135 = vmatprep.subr.mxu0 0.0
    %136 = vmatpush2.msra.mxu0 0.0
    %137 = vmatprep.subr.mxu0 0.0
    %138 = vmatpush2.msra.mxu0 0.0
    %139 = vmatprep.subr.mxu0 0.0
    %140 = vmatpush2.msra.mxu0 0.0
    %141 = vmatprep.subr.mxu0 0.0
    %142 = vmatpush2.msra.mxu0 0.0
    %143 = vmatprep.subr.mxu0 0.0
    %144 = vmatpush2.msra.mxu0 0.0
    %145 = vmatprep.subr.mxu0 0.0
    %146 = vmatpush2.msra.mxu0 0.0
    %147 = vmatprep.subr.mxu0 0.0
    %148 = vmatpush2.msra.mxu0 0.0
    %149 = vmatprep.subr.mxu0 0.0
    %150 = vmatpush2.msra.mxu0 0.0
    %151 = vmatprep.mubr.f32.mxu0 0.0
    %152 = vmatmul.mubr.f32.gmra.mxu0 %v72
    %v153 = vpop.f32.mrf.mxu0
    %v154 = vadd.f32 %v53, %v153
    %v155 = vpop.f32.mrf.mxu0
    %156 = vmatprep.mubr.f32.mxu0 0.0
    %157 = vmatmul.mubr.f32.gmra.mxu0 %v75
    %v158 = vpop.f32.mrf.mxu0
    %v159 = vadd.f32 %v58, %v158
    %v160 = vpop.f32.mrf.mxu0
    %161 = vmatprep.mubr.f32.mxu0 0.0
    %162 = vmatmul.mubr.f32.gmra.mxu0 %v78
    %v163 = vpop.f32.mrf.mxu0
    %v164 = vadd.f32 %v63, %v163
    %v165 = vpop.f32.mrf.mxu0
    %166 = vmatprep.mubr.f32.mxu0 0.0
    %167 = vmatmul.mubr.f32.gmra.mxu0 %v81
    %v168 = vpop.f32.mrf.mxu0
    %v169 = vadd.f32 %v68, %v168
    %v170 = vpop.f32.mrf.mxu0
    %171 = vdwg.mxu0
    %v172 = vtanh.pop %v154
    %v173 = vtanh.pop %v159
    %v174 = vtanh.pop %v164
    %v175 = vtanh.pop %v169
    %v176 = vld [vmem:[%s3] sm:$0xff]
    %v177 = vld [vmem:[%s3 + $0x8] sm:$0xff]
    %v178 = vld [vmem:[%s3 + $0x10] sm:$0xff]
    %v179 = vld [vmem:[%s3 + $0x18] sm:$0xff]
    %v180 = vld [vmem:[%s4] sm:$0xff]
    %v181 = vld [vmem:[%s4 + $0x8] sm:$0xff]
    %v182 = vld [vmem:[%s4 + $0x10] sm:$0xff]
    %v183 = vld [vmem:[%s4 + $0x18] sm:$0xff]
    %185 = vset.pattern.permute.xlu0 0
    %186 = vperm.xlu0 %185, %v180
    %v187 = vpop.permute.xlu0 %186
    %190 = vset.pattern.permute.xlu0 0
    %191 = vperm.xlu0 %190, %v181
    %v192 = vpop.permute.xlu0 %191
    %195 = vset.pattern.permute.xlu0 0
    %196 = vperm.xlu0 %195, %v182
    %v197 = vpop.permute.xlu0 %196
    %200 = vset.pattern.permute.xlu0 0
    %201 = vperm.xlu0 %200, %v183
    %v202 = vpop.permute.xlu0 %201
    %vm204 = vcmask 261120
    %v206 = vsel %vm204, %v176, 0
    %v209 = vsel %vm204, %v177, 0
    %v212 = vsel %vm204, %v178, 0
    %v215 = vsel %vm204, %v179, 0
    %217 = vmatprep.subr.mxu0 0.0
    %218 = vmatpush1.msra.mxu0 0.0
    %219 = vmatprep.subr.mxu0 0.0
    %220 = vmatpush1.msra.mxu0 0.0
    %221 = vmatprep.subr.mxu0 0.0
    %222 = vmatpush1.msra.mxu0 0.0
    %223 = vmatprep.subr.mxu0 0.0
    %224 = vmatpush1.msra.mxu0 0.0
    %225 = vmatprep.subr.mxu0 0.0
    %226 = vmatpush1.msra.mxu0 0.0
    %227 = vmatprep.subr.mxu0 0.0
    %228 = vmatpush1.msra.mxu0 0.0
    %229 = vmatprep.subr.mxu0 0.0
    %230 = vmatpush1.msra.mxu0 0.0
    %231 = vmatprep.subr.mxu0 0.0
    %232 = vmatpush1.msra.mxu0 0.0
    %233 = vmatprep.subr.mxu0 0.0
    %234 = vmatpush1.msra.mxu0 0.0
    %235 = vmatprep.subr.mxu0 0.0
    %236 = vmatpush1.msra.mxu0 0.0
    %237 = vmatprep.subr.mxu0 0.0
    %238 = vmatpush1.msra.mxu0 0.0
    %239 = vmatprep.subr.mxu0 0.0
    %240 = vmatpush1.msra.mxu0 0.0
    %241 = vmatprep.subr.mxu0 0.0
    %242 = vmatpush1.msra.mxu0 %v175
    %243 = vmatprep.subr.mxu0 0.0
    %244 = vmatpush1.msra.mxu0 %v174
    %245 = vmatprep.subr.mxu0 0.0
    %246 = vmatpush1.msra.mxu0 %v173
    %247 = vmatprep.subr.mxu0 0.0
    %248 = vmatpush1.msra.mxu0 %v172
    %249 = vmatprep.subr.mxu0 0.0
    %250 = vmatpush2.msra.mxu0 0.0
    %251 = vmatprep.subr.mxu0 0.0
    %252 = vmatpush2.msra.mxu0 0.0
    %253 = vmatprep.subr.mxu0 0.0
    %254 = vmatpush2.msra.mxu0 0.0
    %255 = vmatprep.subr.mxu0 0.0
    %256 = vmatpush2.msra.mxu0 0.0
    %257 = vmatprep.subr.mxu0 0.0
    %258 = vmatpush2.msra.mxu0 0.0
    %259 = vmatprep.subr.mxu0 0.0
    %260 = vmatpush2.msra.mxu0 0.0
    %261 = vmatprep.subr.mxu0 0.0
    %262 = vmatpush2.msra.mxu0 0.0
    %263 = vmatprep.subr.mxu0 0.0
    %264 = vmatpush2.msra.mxu0 0.0
    %265 = vmatprep.subr.mxu0 0.0
    %266 = vmatpush2.msra.mxu0 0.0
    %267 = vmatprep.subr.mxu0 0.0
    %268 = vmatpush2.msra.mxu0 0.0
    %269 = vmatprep.subr.mxu0 0.0
    %270 = vmatpush2.msra.mxu0 0.0
    %271 = vmatprep.subr.mxu0 0.0
    %272 = vmatpush2.msra.mxu0 0.0
    %273 = vmatprep.subr.mxu0 0.0
    %274 = vmatpush2.msra.mxu0 0.0
    %275 = vmatprep.subr.mxu0 0.0
    %276 = vmatpush2.msra.mxu0 0.0
    %277 = vmatprep.subr.mxu0 0.0
    %278 = vmatpush2.msra.mxu0 0.0
    %279 = vmatprep.subr.mxu0 0.0
    %280 = vmatpush2.msra.mxu0 0.0
    %281 = vmatprep.mubr.f32.mxu0 0.0
    %282 = vmatmul.mubr.f32.gmra.mxu0 %v206
    %v283 = vpop.f32.mrf.mxu0
    %v284 = vadd.f32 %v187, %v283
    %v285 = vpop.f32.mrf.mxu0
    %286 = vmatprep.mubr.f32.mxu0 0.0
    %287 = vmatmul.mubr.f32.gmra.mxu0 %v209
    %v288 = vpop.f32.mrf.mxu0
    %v289 = vadd.f32 %v192, %v288
    %v290 = vpop.f32.mrf.mxu0
    %291 = vmatprep.mubr.f32.mxu0 0.0
    %292 = vmatmul.mubr.f32.gmra.mxu0 %v212
    %v293 = vpop.f32.mrf.mxu0
    %v294 = vadd.f32 %v197, %v293
    %v295 = vpop.f32.mrf.mxu0
    %296 = vmatprep.mubr.f32.mxu0 0.0
    %297 = vmatmul.mubr.f32.gmra.mxu0 %v215
    %v298 = vpop.f32.mrf.mxu0
    %v299 = vadd.f32 %v202, %v298
    %v300 = vpop.f32.mrf.mxu0
    %301 = vdwg.mxu0
    %v302 = vtanh.pop %v284
    %v303 = vtanh.pop %v289
    %v304 = vtanh.pop %v294
    %v305 = vtanh.pop %v299
    %v306 = vld [vmem:[%s5] sm:$0xff]
    %v307 = vld [vmem:[%s5 + $0x8] sm:$0xff]
    %v308 = vld [vmem:[%s5 + $0x10] sm:$0xff]
    %v309 = vld [vmem:[%s5 + $0x18] sm:$0xff]
    %v310 = vld [vmem:[%s6] sm:$0xff]
    %v311 = vld [vmem:[%s6 + $0x8] sm:$0xff]
    %v312 = vld [vmem:[%s6 + $0x10] sm:$0xff]
    %v313 = vld [vmem:[%s6 + $0x18] sm:$0xff]
    %315 = vset.pattern.permute.xlu0 0
    %316 = vperm.xlu0 %315, %v310
    %v317 = vpop.permute.xlu0 %316
    %320 = vset.pattern.permute.xlu0 0
    %321 = vperm.xlu0 %320, %v311
    %v322 = vpop.permute.xlu0 %321
    %325 = vset.pattern.permute.xlu0 0
    %326 = vperm.xlu0 %325, %v312
    %v327 = vpop.permute.xlu0 %326
    %330 = vset.pattern.permute.xlu0 0
    %331 = vperm.xlu0 %330, %v313
    %v332 = vpop.permute.xlu0 %331
    %v335 = vsel %vm204, %v306, 0
    %v338 = vsel %vm204, %v307, 0
    %v341 = vsel %vm204, %v308, 0
    %v344 = vsel %vm204, %v309, 0
    %346 = vmatprep.subr.mxu0 0.0
    %347 = vmatpush1.msra.mxu0 0.0
    %348 = vmatprep.subr.mxu0 0.0
    %349 = vmatpush1.msra.mxu0 0.0
    %350 = vmatprep.subr.mxu0 0.0
    %351 = vmatpush1.msra.mxu0 0.0
    %352 = vmatprep.subr.mxu0 0.0
    %353 = vmatpush1.msra.mxu0 0.0
    %354 = vmatprep.subr.mxu0 0.0
    %355 = vmatpush1.msra.mxu0 0.0
    %356 = vmatprep.subr.mxu0 0.0
    %357 = vmatpush1.msra.mxu0 0.0
    %358 = vmatprep.subr.mxu0 0.0
    %359 = vmatpush1.msra.mxu0 0.0
    %360 = vmatprep.subr.mxu0 0.0
    %361 = vmatpush1.msra.mxu0 0.0
    %362 = vmatprep.subr.mxu0 0.0
    %363 = vmatpush1.msra.mxu0 0.0
    %364 = vmatprep.subr.mxu0 0.0
    %365 = vmatpush1.msra.mxu0 0.0
    %366 = vmatprep.subr.mxu0 0.0
    %367 = vmatpush1.msra.mxu0 0.0
    %368 = vmatprep.subr.mxu0 0.0
    %369 = vmatpush1.msra.mxu0 0.0
    %370 = vmatprep.subr.mxu0 0.0
    %371 = vmatpush1.msra.mxu0 %v305
    %372 = vmatprep.subr.mxu0 0.0
    %373 = vmatpush1.msra.mxu0 %v304
    %374 = vmatprep.subr.mxu0 0.0
    %375 = vmatpush1.msra.mxu0 %v303
    %376 = vmatprep.subr.mxu0 0.0
    %377 = vmatpush1.msra.mxu0 %v302
    %378 = vmatprep.subr.mxu0 0.0
    %379 = vmatpush2.msra.mxu0 0.0
    %380 = vmatprep.subr.mxu0 0.0
    %381 = vmatpush2.msra.mxu0 0.0
    %382 = vmatprep.subr.mxu0 0.0
    %383 = vmatpush2.msra.mxu0 0.0
    %384 = vmatprep.subr.mxu0 0.0
    %385 = vmatpush2.msra.mxu0 0.0
    %386 = vmatprep.subr.mxu0 0.0
    %387 = vmatpush2.msra.mxu0 0.0
    %388 = vmatprep.subr.mxu0 0.0
    %389 = vmatpush2.msra.mxu0 0.0
    %390 = vmatprep.subr.mxu0 0.0
    %391 = vmatpush2.msra.mxu0 0.0
    %392 = vmatprep.subr.mxu0 0.0
    %393 = vmatpush2.msra.mxu0 0.0
    %394 = vmatprep.subr.mxu0 0.0
    %395 = vmatpush2.msra.mxu0 0.0
    %396 = vmatprep.subr.mxu0 0.0
    %397 = vmatpush2.msra.mxu0 0.0
    %398 = vmatprep.subr.mxu0 0.0
    %399 = vmatpush2.msra.mxu0 0.0
    %400 = vmatprep.subr.mxu0 0.0
    %401 = vmatpush2.msra.mxu0 0.0
    %402 = vmatprep.subr.mxu0 0.0
    %403 = vmatpush2.msra.mxu0 0.0
    %404 = vmatprep.subr.mxu0 0.0
    %405 = vmatpush2.msra.mxu0 0.0
    %406 = vmatprep.subr.mxu0 0.0
    %407 = vmatpush2.msra.mxu0 0.0
    %408 = vmatprep.subr.mxu0 0.0
    %409 = vmatpush2.msra.mxu0 0.0
    %410 = vmatprep.mubr.f32.mxu0 0.0
    %411 = vmatmul.mubr.f32.gmra.mxu0 %v335
    %v412 = vpop.f32.mrf.mxu0
    %v413 = vadd.f32 %v317, %v412
    %v414 = vpop.f32.mrf.mxu0
    %415 = vmatprep.mubr.f32.mxu0 0.0
    %416 = vmatmul.mubr.f32.gmra.mxu0 %v338
    %v417 = vpop.f32.mrf.mxu0
    %v418 = vadd.f32 %v322, %v417
    %v419 = vpop.f32.mrf.mxu0
    %420 = vmatprep.mubr.f32.mxu0 0.0
    %421 = vmatmul.mubr.f32.gmra.mxu0 %v341
    %v422 = vpop.f32.mrf.mxu0
    %v423 = vadd.f32 %v327, %v422
    %v424 = vpop.f32.mrf.mxu0
    %425 = vmatprep.mubr.f32.mxu0 0.0
    %426 = vmatmul.mubr.f32.gmra.mxu0 %v344
    %v427 = vpop.f32.mrf.mxu0
    %v428 = vadd.f32 %v332, %v427
    %v429 = vpop.f32.mrf.mxu0
    %430 = vdwg.mxu0
    %v431 = vtanh.pop %v413
    %v432 = vtanh.pop %v418
    %v433 = vtanh.pop %v423
    %v434 = vtanh.pop %v428
    %v435 = vadd.f32 %v431, %v172
    %v436 = vadd.f32 %v432, %v173
    %v437 = vadd.f32 %v433, %v174
    %v438 = vadd.f32 %v434, %v175
    %v439 = vld [vmem:[%s7] sm:$0xff]
    %v440 = vld [vmem:[%s7 + $0x8] sm:$0xff]
    %v441 = vld [vmem:[%s7 + $0x10] sm:$0xff]
    %v442 = vld [vmem:[%s7 + $0x18] sm:$0xff]
    %v443 = vld [vmem:[%s8] sm:$0xff]
    %v444 = vld [vmem:[%s8 + $0x8] sm:$0xff]
    %v445 = vld [vmem:[%s8 + $0x10] sm:$0xff]
    %v446 = vld [vmem:[%s8 + $0x18] sm:$0xff]
    %448 = vset.pattern.permute.xlu0 0
    %449 = vperm.xlu0 %448, %v443
    %v450 = vpop.permute.xlu0 %449
    %453 = vset.pattern.permute.xlu0 0
    %454 = vperm.xlu0 %453, %v444
    %v455 = vpop.permute.xlu0 %454
    %458 = vset.pattern.permute.xlu0 0
    %459 = vperm.xlu0 %458, %v445
    %v460 = vpop.permute.xlu0 %459
    %463 = vset.pattern.permute.xlu0 0
    %464 = vperm.xlu0 %463, %v446
    %v465 = vpop.permute.xlu0 %464
    %v468 = vsel %vm204, %v439, 0
    %v471 = vsel %vm204, %v440, 0
    %v474 = vsel %vm204, %v441, 0
    %v477 = vsel %vm204, %v442, 0
    %479 = vmatprep.subr.mxu0 0.0
    %480 = vmatpush1.msra.mxu0 0.0
    %481 = vmatprep.subr.mxu0 0.0
    %482 = vmatpush1.msra.mxu0 0.0
    %483 = vmatprep.subr.mxu0 0.0
    %484 = vmatpush1.msra.mxu0 0.0
    %485 = vmatprep.subr.mxu0 0.0
    %486 = vmatpush1.msra.mxu0 0.0
    %487 = vmatprep.subr.mxu0 0.0
    %488 = vmatpush1.msra.mxu0 0.0
    %489 = vmatprep.subr.mxu0 0.0
    %490 = vmatpush1.msra.mxu0 0.0
    %491 = vmatprep.subr.mxu0 0.0
    %492 = vmatpush1.msra.mxu0 0.0
    %493 = vmatprep.subr.mxu0 0.0
    %494 = vmatpush1.msra.mxu0 0.0
    %495 = vmatprep.subr.mxu0 0.0
    %496 = vmatpush1.msra.mxu0 0.0
    %497 = vmatprep.subr.mxu0 0.0
    %498 = vmatpush1.msra.mxu0 0.0
    %499 = vmatprep.subr.mxu0 0.0
    %500 = vmatpush1.msra.mxu0 0.0
    %501 = vmatprep.subr.mxu0 0.0
    %502 = vmatpush1.msra.mxu0 0.0
    %503 = vmatprep.subr.mxu0 0.0
    %504 = vmatpush1.msra.mxu0 %v438
    %505 = vmatprep.subr.mxu0 0.0
    %506 = vmatpush1.msra.mxu0 %v437
    %507 = vmatprep.subr.mxu0 0.0
    %508 = vmatpush1.msra.mxu0 %v436
    %509 = vmatprep.subr.mxu0 0.0
    %510 = vmatpush1.msra.mxu0 %v435
    %511 = vmatprep.subr.mxu0 0.0
    %512 = vmatpush2.msra.mxu0 0.0
    %513 = vmatprep.subr.mxu0 0.0
    %514 = vmatpush2.msra.mxu0 0.0
    %515 = vmatprep.subr.mxu0 0.0
    %516 = vmatpush2.msra.mxu0 0.0
    %517 = vmatprep.subr.mxu0 0.0
    %518 = vmatpush2.msra.mxu0 0.0
    %519 = vmatprep.subr.mxu0 0.0
    %520 = vmatpush2.msra.mxu0 0.0
    %521 = vmatprep.subr.mxu0 0.0
    %522 = vmatpush2.msra.mxu0 0.0
    %523 = vmatprep.subr.mxu0 0.0
    %524 = vmatpush2.msra.mxu0 0.0
    %525 = vmatprep.subr.mxu0 0.0
    %526 = vmatpush2.msra.mxu0 0.0
    %527 = vmatprep.subr.mxu0 0.0
    %528 = vmatpush2.msra.mxu0 0.0
    %529 = vmatprep.subr.mxu0 0.0
    %530 = vmatpush2.msra.mxu0 0.0
    %531 = vmatprep.subr.mxu0 0.0
    %532 = vmatpush2.msra.mxu0 0.0
    %533 = vmatprep.subr.mxu0 0.0
    %534 = vmatpush2.msra.mxu0 0.0
    %535 = vmatprep.subr.mxu0 0.0
    %536 = vmatpush2.msra.mxu0 0.0
    %537 = vmatprep.subr.mxu0 0.0
    %538 = vmatpush2.msra.mxu0 0.0
    %539 = vmatprep.subr.mxu0 0.0
    %540 = vmatpush2.msra.mxu0 0.0
    %541 = vmatprep.subr.mxu0 0.0
    %542 = vmatpush2.msra.mxu0 0.0
    %543 = vmatprep.mubr.f32.mxu0 0.0
    %544 = vmatmul.mubr.f32.gmra.mxu0 %v468
    %v545 = vpop.f32.mrf.mxu0
    %v546 = vadd.f32 %v450, %v545
    %v547 = vpop.f32.mrf.mxu0
    %548 = vmatprep.mubr.f32.mxu0 0.0
    %549 = vmatmul.mubr.f32.gmra.mxu0 %v471
    %v550 = vpop.f32.mrf.mxu0
    %v551 = vadd.f32 %v455, %v550
    %v552 = vpop.f32.mrf.mxu0
    %553 = vmatprep.mubr.f32.mxu0 0.0
    %554 = vmatmul.mubr.f32.gmra.mxu0 %v474
    %v555 = vpop.f32.mrf.mxu0
    %v556 = vadd.f32 %v460, %v555
    %v557 = vpop.f32.mrf.mxu0
    %558 = vmatprep.mubr.f32.mxu0 0.0
    %559 = vmatmul.mubr.f32.gmra.mxu0 %v477
    %v560 = vpop.f32.mrf.mxu0
    %v561 = vadd.f32 %v465, %v560
    %v562 = vpop.f32.mrf.mxu0
    %563 = vdwg.mxu0
    %v564 = vtanh.pop %v546
    %v565 = vtanh.pop %v551
    %v566 = vtanh.pop %v556
    %v567 = vtanh.pop %v561
    %v568 = vadd.f32 %v564, %v302
    %v569 = vadd.f32 %v565, %v303
    %v570 = vadd.f32 %v566, %v304
    %v571 = vadd.f32 %v567, %v305
    %v572 = vld [vmem:[%s9] sm:$0x1]
    %v573 = vld [vmem:[#allocation2] sm:$0x1]
    %575 = vset.pattern.permute.xlu0 0
    %576 = vperm.xlu0 %575, %v573
    %v577 = vpop.permute.xlu0 %576
    %v579 = vlaneseq
    %v580 = vshrl.u32 %v579, 7
    %v581 = vsub.s32 0, %v580
    %v582 = vrot.slane %v577, %v581
    %v584 = vsel %vm204, %v572, 0
    %586 = vmatprep.subr.mxu0 0.0
    %587 = vmatpush1.msra.mxu0 0.0
    %588 = vmatprep.subr.mxu0 0.0
    %589 = vmatpush1.msra.mxu0 0.0
    %590 = vmatprep.subr.mxu0 0.0
    %591 = vmatpush1.msra.mxu0 0.0
    %592 = vmatprep.subr.mxu0 0.0
    %593 = vmatpush1.msra.mxu0 0.0
    %594 = vmatprep.subr.mxu0 0.0
    %595 = vmatpush1.msra.mxu0 0.0
    %596 = vmatprep.subr.mxu0 0.0
    %597 = vmatpush1.msra.mxu0 0.0
    %598 = vmatprep.subr.mxu0 0.0
    %599 = vmatpush1.msra.mxu0 0.0
    %600 = vmatprep.subr.mxu0 0.0
    %601 = vmatpush1.msra.mxu0 0.0
    %602 = vmatprep.subr.mxu0 0.0
    %603 = vmatpush1.msra.mxu0 0.0
    %604 = vmatprep.subr.mxu0 0.0
    %605 = vmatpush1.msra.mxu0 0.0
    %606 = vmatprep.subr.mxu0 0.0
    %607 = vmatpush1.msra.mxu0 0.0
    %608 = vmatprep.subr.mxu0 0.0
    %609 = vmatpush1.msra.mxu0 0.0
    %610 = vmatprep.subr.mxu0 0.0
    %611 = vmatpush1.msra.mxu0 %v571
    %612 = vmatprep.subr.mxu0 0.0
    %613 = vmatpush1.msra.mxu0 %v570
    %614 = vmatprep.subr.mxu0 0.0
    %615 = vmatpush1.msra.mxu0 %v569
    %616 = vmatprep.subr.mxu0 0.0
    %617 = vmatpush1.msra.mxu0 %v568
    %618 = vmatprep.subr.mxu0 0.0
    %619 = vmatpush2.msra.mxu0 0.0
    %620 = vmatprep.subr.mxu0 0.0
    %621 = vmatpush2.msra.mxu0 0.0
    %622 = vmatprep.subr.mxu0 0.0
    %623 = vmatpush2.msra.mxu0 0.0
    %624 = vmatprep.subr.mxu0 0.0
    %625 = vmatpush2.msra.mxu0 0.0
    %626 = vmatprep.subr.mxu0 0.0
    %627 = vmatpush2.msra.mxu0 0.0
    %628 = vmatprep.subr.mxu0 0.0
    %629 = vmatpush2.msra.mxu0 0.0
    %630 = vmatprep.subr.mxu0 0.0
    %631 = vmatpush2.msra.mxu0 0.0
    %632 = vmatprep.subr.mxu0 0.0
    %633 = vmatpush2.msra.mxu0 0.0
    %634 = vmatprep.subr.mxu0 0.0
    %635 = vmatpush2.msra.mxu0 0.0
    %636 = vmatprep.subr.mxu0 0.0
    %637 = vmatpush2.msra.mxu0 0.0
    %638 = vmatprep.subr.mxu0 0.0
    %639 = vmatpush2.msra.mxu0 0.0
    %640 = vmatprep.subr.mxu0 0.0
    %641 = vmatpush2.msra.mxu0 0.0
    %642 = vmatprep.subr.mxu0 0.0
    %643 = vmatpush2.msra.mxu0 0.0
    %644 = vmatprep.subr.mxu0 0.0
    %645 = vmatpush2.msra.mxu0 0.0
    %646 = vmatprep.subr.mxu0 0.0
    %647 = vmatpush2.msra.mxu0 0.0
    %648 = vmatprep.subr.mxu0 0.0
    %649 = vmatpush2.msra.mxu0 0.0
    %650 = vmatprep.mubr.f32.mxu0 0.0
    %651 = vmatmul.mubr.f32.gmra.mxu0 %v584
    %v652 = vpop.f32.mrf.mxu0
    %v653 = vadd.f32 %v582, %v652
    %v654 = vpop.f32.mrf.mxu0
    %655 = vdwg.mxu0
    %656 = vst [vmem:[#allocation3] sm:$0x1] %v653
    // Predicated region
    $region46: #{tpu_custom_call.1} parent=1 // pred_check
      _
    $region47: #{tpu_custom_call.1} parent=1 // pred_check_branch
      %658 = sbr.rel (0) target = $region49
    $region48: #{tpu_custom_call.1} parent=1 // pred_region
      %s660 = ssub.s32 16, 16
      %661 = vsyncadd [#allocation4], %s660
      %s663 = sshll.u32 [#allocation3], 4
      %s664 = int_to_ptr.vmem [resolvable:$true] %s663
      %666 = dma.vmem_to_hbm [thread:$0]  %s664, 16, %s11, [#allocation4]
    $region49: #{tpu_custom_call.1} parent=1 // pred_fallthru
      _
    // Predicated region
    $region50: #{tpu_custom_call.1} parent=1 // pred_check
      _
    $region51: #{tpu_custom_call.1} parent=1 // pred_check_branch
      %668 = sbr.rel (0) target = $region53
    $region52: #{tpu_custom_call.1} parent=1 // pred_region
      %669 = dma.done [#allocation4], 16
    $region53: #{tpu_custom_call.1} parent=1 // pred_fallthru
      _
    %670 = vsyncpa [#allocation4], 1

</llo_original>
